<compile_context>
chip_gen: v7x
topology: tpu7x:2x2x1
jax: 0.10.0
libtpu: 0.0.40
codegen_flags: <defaults>
</compile_context>

<pallas_src>
import functools

import jax
import jax.numpy as jnp
import numpy as np
from jax.experimental import pallas as pl
from jax.experimental.pallas import tpu as pltpu

# ----- fixed hyper-parameters (mirror ResampleLoss.__init__ defaults) -----
MAP_ALPHA = 10.0
MAP_BETA = 0.2
MAP_GAMMA = 0.1
NEG_SCALE = 5.0
INV_NEG_SCALE = 1.0 / NEG_SCALE
INIT_BIAS_SCALE = 0.1
LOSS_WEIGHT = 1.0
EPS = 1e-8


def _ceil_to(x, m):
    return ((x + m - 1) // m) * m


def resample_loss_kernel(score_ref, label_ref, freq_inv_ref, init_bias_ref,
                         partial_ref, *, tb, cp, actual_b, actual_c, b_pad):
    logits = score_ref[...].astype(jnp.float32)      # (tb, cp)
    label = label_ref[...].astype(jnp.float32)       # (tb, cp)  {0,1}
    freq_inv = freq_inv_ref[...]                     # (1, cp)
    init_bias = init_bias_ref[...]                   # (1, cp)

    # Validity masks only materialize when padding actually happened.
    col_mask = None
    if cp != actual_c:
        col_mask = jax.lax.broadcasted_iota(jnp.int32, (1, cp), 1) < actual_c
    row_mask = None
    if b_pad != actual_b:
        row_ids = (jax.lax.broadcasted_iota(jnp.int32, (tb, 1), 0)
                   + pl.program_id(0) * tb)
        row_mask = row_ids < actual_b

    # --- rebalance_weight(label) ---
    repeat_rate = jnp.sum(label * freq_inv, axis=1, keepdims=True)   # (tb, 1)
    # EPS guard: rows with zero positives stay finite (reference -> inf/NaN).
    inv_rr = pl.reciprocal(jnp.maximum(repeat_rate, EPS), approx=True)  # (tb, 1)
    pos_weight = freq_inv * inv_rr                                   # (tb, cp)
    weight = jax.nn.sigmoid(MAP_BETA * (pos_weight - MAP_GAMMA)) + MAP_ALPHA

    # --- weight_norm = 'by_instance' ---
    if col_mask is not None:
        # Zero padded columns: keeps them out of the max AND makes their loss 0.
        weight = jnp.where(col_mask, weight, 0.0)
    inv_max = pl.reciprocal(jnp.max(weight, axis=-1, keepdims=True),
                            approx=True)                             # (tb, 1)
    if row_mask is not None:
        # Fold the batch-padding mask into the per-row scalar: padded rows get
        # weight == 0 everywhere, hence loss == 0, without a (tb, cp) select.
        inv_max = jnp.where(row_mask, inv_max, 0.0)
    weight = weight * inv_max

    # --- logit_reg_functions (fused blends; identical to the reference algebra) ---
    logits = logits + init_bias
    logits = logits * (NEG_SCALE + label * (1.0 - NEG_SCALE))
    weight = weight * (INV_NEG_SCALE + label * (1.0 - INV_NEG_SCALE))

    # --- binary cross entropy with logits (numerically stable) ---
    bce = (jnp.maximum(logits, 0.0) - logits * label
           + jnp.log1p(jnp.exp(-jnp.abs(logits))))
    loss = bce * weight        # already 0 at padded rows/columns via `weight`

    # Lane-dense per-tile partial sum: fold rows into sublane groups of 8.
    partial = loss.reshape(tb // 8, 8, cp).sum(axis=0)               # (8, cp)
    partial_ref[...] = partial[None, :, :]


def resample_loss(cls_score, label, class_freq, neg_class_freq):
    B, C = cls_score.shape
    Cp = _ceil_to(C, 128)

    # --- parameter setup (plain JAX, mirrors __init__) ---
    class_freq = jnp.clip(class_freq.astype(jnp.float32), EPS, None)
    neg_class_freq = jnp.clip(neg_class_freq.astype(jnp.float32), EPS, None)
    train_num = class_freq[0] + neg_class_freq[0]
    freq_inv = (1.0 / class_freq).reshape(1, C)
    init_bias = (-jnp.log(train_num / class_freq - 1.0)
                 * INIT_BIAS_SCALE / NEG_SCALE).reshape(1, C)
    if Cp != C:
        freq_inv = jnp.pad(freq_inv, ((0, 0), (0, Cp - C)))
        init_bias = jnp.pad(init_bias, ((0, 0), (0, Cp - C)))

    # --- tile sizing: target ~3 MiB of HBM traffic per grid step, capped by a
    #     generation-safe pipelined-VMEM budget (2 inputs x 2 pipeline buffers). ---
    score_bytes = jnp.dtype(cls_score.dtype).itemsize
    label_bytes = jnp.dtype(label.dtype).itemsize
    bytes_per_row = Cp * (score_bytes + label_bytes)

    TARGET_STEP_BYTES = 3 * 1024 * 1024       # ~2-4 MiB/step amortizes step overhead
    VMEM_PIPELINE_BUDGET = 20 * 1024 * 1024   # safe on v7x (64 MiB VMEM) and v5e/v6e
    MAX_TB = 4096

    tb = min(MAX_TB,
             TARGET_STEP_BYTES // bytes_per_row,
             VMEM_PIPELINE_BUDGET // (2 * bytes_per_row))
    tb = max(16, (tb // 16) * 16)             # multiple of 16 (bf16-safe tiling)
    tb = min(tb, _ceil_to(B, 16))             # never pad B past one 16-row group

    # v7x megacore balance: prefer >=2 tiles (and an even count) when B allows.
    if B > 2 * 16:
        tb = min(tb, _ceil_to(pl.cdiv(B, 2), 16))
    num_tiles = pl.cdiv(B, tb)
    if num_tiles > 2 and num_tiles % 2 == 1:
        tb = max(16, _ceil_to(pl.cdiv(B, num_tiles + 1), 16))
        num_tiles = pl.cdiv(B, tb)
    B_pad = num_tiles * tb

    # --- pad inputs (masked inside the kernel); no dtype up-cast in the wrapper ---
    if B_pad != B or Cp != C:
        cls_score = jnp.pad(cls_score, ((0, B_pad - B), (0, Cp - C)))
        label = jnp.pad(label, ((0, B_pad - B), (0, Cp - C)))

    kernel = functools.partial(resample_loss_kernel, tb=tb, cp=Cp,
                               actual_b=B, actual_c=C, b_pad=B_pad)

    partials = pl.pallas_call(
        kernel,
        out_shape=jax.ShapeDtypeStruct((num_tiles, 8, Cp), jnp.float32),
        grid_spec=pltpu.PrefetchScalarGridSpec(
            num_scalar_prefetch=0,
            grid=(num_tiles,),
            in_specs=[
                pl.BlockSpec((tb, Cp), lambda i: (i, 0)),   # cls_score tile
                pl.BlockSpec((tb, Cp), lambda i: (i, 0)),   # label tile
                pl.BlockSpec((1, Cp), lambda i: (0, 0)),    # freq_inv (resident)
                pl.BlockSpec((1, Cp), lambda i: (0, 0)),    # init_bias (resident)
            ],
            out_specs=pl.BlockSpec((1, 8, Cp), lambda i: (i, 0, 0)),
        ),
        compiler_params=pltpu.CompilerParams(
            dimension_semantics=("parallel",),
            vmem_limit_bytes=32 * 1024 * 1024),
    )(cls_score, label, freq_inv, init_bias)

    # Tiny final reduction + 'mean' scaling in the wrapper.
    return LOSS_WEIGHT * jnp.sum(partials) / (B * C)


def reference_resample_loss(cls_score, label, class_freq, neg_class_freq):
    """Pure-JAX mirror of the PyTorch forward for the same config (exact divides)."""
    class_freq = jnp.clip(class_freq.astype(jnp.float32), EPS, None)
    neg_class_freq = jnp.clip(neg_class_freq.astype(jnp.float32), EPS, None)
    train_num = class_freq[0] + neg_class_freq[0]
    freq_inv = 1.0 / class_freq
    init_bias = -jnp.log(train_num / class_freq - 1.0) * INIT_BIAS_SCALE / NEG_SCALE

    cls_score = cls_score.astype(jnp.float32)
    label = label.astype(jnp.float32)
    repeat_rate = jnp.sum(label * freq_inv[None, :], axis=1, keepdims=True)
    pos_weight = freq_inv[None, :] / repeat_rate
    weight = jax.nn.sigmoid(MAP_BETA * (pos_weight - MAP_GAMMA)) + MAP_ALPHA
    weight = weight / jnp.max(weight, axis=-1, keepdims=True)

    logits = cls_score + init_bias[None, :]
    logits = logits * (1.0 - label) * NEG_SCALE + logits * label
    weight = weight / NEG_SCALE * (1.0 - label) + weight * label

    bce = (jnp.maximum(logits, 0.0) - logits * label
           + jnp.log1p(jnp.exp(-jnp.abs(logits))))
    return LOSS_WEIGHT * jnp.mean(bce * weight)


if __name__ == "__main__":
    # Small shapes that still exercise both row padding (40 -> 64) and column
    # padding (96 -> 128), plus the 2-tile megacore split.
    B, C = 40, 96
    key = jax.random.PRNGKey(0)
    k1, k2, k3 = jax.random.split(key, 3)

    # bf16 end-to-end for the two tensor inputs; the kernel up-casts in VMEM.
    cls_score = jax.random.normal(k1, (B, C), dtype=jnp.float32).astype(jnp.bfloat16)
    label = (jax.random.uniform(k2, (B, C)) < 0.3).astype(jnp.bfloat16)
    # guarantee at least one positive per row (rebalance weight divides by repeat_rate)
    label = label.at[:, 0].set(1.0)

    # deterministic synthetic class frequency statistics
    class_freq = jax.random.randint(k3, (C,), 5, 150).astype(jnp.float32)
    train_num_total = 200.0
    neg_class_freq = train_num_total - class_freq

    loss = resample_loss(cls_score, label, class_freq, neg_class_freq)
    loss = jax.block_until_ready(loss)

    ref = reference_resample_loss(cls_score, label, class_freq, neg_class_freq)
    ref = jax.block_until_ready(ref)

    # pl.reciprocal(approx=True) in the kernel introduces a small (<~1e-3 relative)
    # deviation from the exact-divide reference; tolerance set accordingly.
    np.testing.assert_allclose(np.asarray(loss), np.asarray(ref),
                               rtol=5e-3, atol=5e-4)
    print("KERNEL_OK")
</pallas_src>

<mosaic_0001>
module attributes {stable_mosaic.version = 11 : i64} {
  func.func @resample_loss_kernel(%arg0: i32, %arg1: memref<32x128xbf16, #tpu.memory_space<vmem>>, %arg2: memref<32x128xbf16, #tpu.memory_space<vmem>>, %arg3: memref<1x128xf32, #tpu.memory_space<vmem>>, %arg4: memref<1x128xf32, #tpu.memory_space<vmem>>, %arg5: memref<1x8x128xf32, #tpu.memory_space<vmem>>) attributes {dimension_semantics = [#tpu.dimension_semantics<parallel>], iteration_bounds = array<i64: 2>, scalar_prefetch = 0 : i64, scratch_operands = 0 : i64, tpu.core_type = #tpu.core_type<tc>, window_params = [{transform_indices = @transform_0, window_bounds = array<i64: 32, 128>}, {transform_indices = @transform_1, window_bounds = array<i64: 32, 128>}, {pipeline_mode = #tpu.pipeline_mode<synchronous>, transform_indices = @transform_2, window_bounds = array<i64: 1, 128>}, {pipeline_mode = #tpu.pipeline_mode<synchronous>, transform_indices = @transform_3, window_bounds = array<i64: 1, 128>}, {transform_indices = @transform_4, window_bounds = array<i64: 1, 8, 128>}]} {
    %c0 = arith.constant 0 : index
    %c0_0 = arith.constant 0 : index
    %0 = vector.load %arg1[%c0, %c0_0] : memref<32x128xbf16, #tpu.memory_space<vmem>>, vector<32x128xbf16>
    %1 = arith.extf %0 : vector<32x128xbf16> to vector<32x128xf32>
    %c0_1 = arith.constant 0 : index
    %c0_2 = arith.constant 0 : index
    %2 = vector.load %arg2[%c0_1, %c0_2] : memref<32x128xbf16, #tpu.memory_space<vmem>>, vector<32x128xbf16>
    %3 = arith.extf %2 : vector<32x128xbf16> to vector<32x128xf32>
    %c0_3 = arith.constant 0 : index
    %c0_4 = arith.constant 0 : index
    %4 = vector.load %arg3[%c0_3, %c0_4] : memref<1x128xf32, #tpu.memory_space<vmem>>, vector<1x128xf32>
    %c0_5 = arith.constant 0 : index
    %c0_6 = arith.constant 0 : index
    %5 = vector.load %arg4[%c0_5, %c0_6] : memref<1x128xf32, #tpu.memory_space<vmem>>, vector<1x128xf32>
    %6 = tpu.iota {dimensions = array<i32: 1>} : vector<1x128xi32>
    %c96_i32 = arith.constant 96 : i32
    %7 = vector.broadcast %c96_i32 : i32 to vector<1x128xi32>
    %8 = arith.cmpi slt, %6, %7 : vector<1x128xi32>
    %9 = tpu.iota {dimensions = array<i32: 0>} : vector<32x1xi32>
    %c32_i32 = arith.constant 32 : i32
    %10 = arith.muli %arg0, %c32_i32 : i32
    %11 = vector.broadcast %10 : i32 to vector<32x1xi32>
    %12 = arith.addi %9, %11 : vector<32x1xi32>
    %c40_i32 = arith.constant 40 : i32
    %13 = vector.broadcast %c40_i32 : i32 to vector<32x1xi32>
    %14 = arith.cmpi slt, %12, %13 : vector<32x1xi32>
    %15 = vector.broadcast %4 : vector<1x128xf32> to vector<32x128xf32>
    %16 = arith.mulf %3, %15 : vector<32x128xf32>
    %cst = arith.constant dense<0.000000e+00> : vector<32xf32>
    %17 = vector.multi_reduction <add>, %16, %cst [1] : vector<32x128xf32> to vector<32xf32>
    %18 = vector.shape_cast %17 : vector<32xf32> to vector<32x1xf32>
    %cst_7 = arith.constant 9.99999993E-9 : f32
    %19 = vector.broadcast %cst_7 : f32 to vector<32x1xf32>
    %20 = arith.maximumf %18, %19 : vector<32x1xf32>
    %21 = tpu.reciprocal %20 {approx = true} : vector<32x1xf32> -> vector<32x1xf32>
    %22 = vector.broadcast %4 : vector<1x128xf32> to vector<32x128xf32>
    %23 = vector.broadcast %21 : vector<32x1xf32> to vector<32x128xf32>
    %24 = arith.mulf %22, %23 : vector<32x128xf32>
    %cst_8 = arith.constant 1.000000e-01 : f32
    %25 = vector.broadcast %cst_8 : f32 to vector<32x128xf32>
    %26 = arith.subf %24, %25 : vector<32x128xf32>
    %cst_9 = arith.constant 2.000000e-01 : f32
    %27 = vector.broadcast %cst_9 : f32 to vector<32x128xf32>
    %28 = arith.mulf %27, %26 : vector<32x128xf32>
    %29 = arith.negf %28 : vector<32x128xf32>
    %30 = math.exp %29 : vector<32x128xf32>
    %cst_10 = arith.constant 1.000000e+00 : f32
    %31 = vector.broadcast %cst_10 : f32 to vector<32x128xf32>
    %32 = arith.addf %31, %30 : vector<32x128xf32>
    %33 = arith.divf %31, %32 : vector<32x128xf32>
    %cst_11 = arith.constant 1.000000e+01 : f32
    %34 = vector.broadcast %cst_11 : f32 to vector<32x128xf32>
    %35 = arith.addf %33, %34 : vector<32x128xf32>
    %cst_12 = arith.constant 0.000000e+00 : f32
    %36 = vector.shape_cast %8 : vector<1x128xi1> to vector<1x128xi1>
    %37 = vector.broadcast %36 : vector<1x128xi1> to vector<32x128xi1>
    %38 = vector.broadcast %cst_12 : f32 to vector<32x128xf32>
    %39 = arith.select %37, %35, %38 : vector<32x128xi1>, vector<32x128xf32>
    %cst_13 = arith.constant dense<0xFF800000> : vector<32xf32>
    %40 = vector.multi_reduction <maximumf>, %39, %cst_13 [1] : vector<32x128xf32> to vector<32xf32>
    %41 = vector.shape_cast %40 : vector<32xf32> to vector<32x1xf32>
    %42 = tpu.reciprocal %41 {approx = true} : vector<32x1xf32> -> vector<32x1xf32>
    %cst_14 = arith.constant 0.000000e+00 : f32
    %43 = vector.broadcast %cst_14 : f32 to vector<32x1xf32>
    %44 = arith.select %14, %42, %43 : vector<32x1xi1>, vector<32x1xf32>
    %45 = vector.broadcast %44 : vector<32x1xf32> to vector<32x128xf32>
    %46 = arith.mulf %39, %45 : vector<32x128xf32>
    %47 = vector.broadcast %5 : vector<1x128xf32> to vector<32x128xf32>
    %48 = arith.addf %1, %47 : vector<32x128xf32>
    %cst_15 = arith.constant -4.000000e+00 : f32
    %49 = vector.broadcast %cst_15 : f32 to vector<32x128xf32>
    %50 = arith.mulf %3, %49 : vector<32x128xf32>
    %cst_16 = arith.constant 5.000000e+00 : f32
    %51 = vector.broadcast %cst_16 : f32 to vector<32x128xf32>
    %52 = arith.addf %51, %50 : vector<32x128xf32>
    %53 = arith.mulf %48, %52 : vector<32x128xf32>
    %cst_17 = arith.constant 8.000000e-01 : f32
    %54 = vector.broadcast %cst_17 : f32 to vector<32x128xf32>
    %55 = arith.mulf %3, %54 : vector<32x128xf32>
    %cst_18 = arith.constant 2.000000e-01 : f32
    %56 = vector.broadcast %cst_18 : f32 to vector<32x128xf32>
    %57 = arith.addf %56, %55 : vector<32x128xf32>
    %58 = arith.mulf %46, %57 : vector<32x128xf32>
    %cst_19 = arith.constant 0.000000e+00 : f32
    %59 = vector.broadcast %cst_19 : f32 to vector<32x128xf32>
    %60 = arith.maximumf %53, %59 : vector<32x128xf32>
    %61 = arith.mulf %53, %3 : vector<32x128xf32>
    %62 = arith.subf %60, %61 : vector<32x128xf32>
    %63 = math.absf %53 : vector<32x128xf32>
    %cst_20 = arith.constant 0.000000e+00 : f32
    %64 = vector.broadcast %cst_20 : f32 to vector<32x128xf32>
    %65 = arith.subf %64, %63 : vector<32x128xf32>
    %66 = math.exp %65 : vector<32x128xf32>
    %67 = math.log1p %66 : vector<32x128xf32>
    %68 = arith.addf %62, %67 : vector<32x128xf32>
    %69 = arith.mulf %68, %58 : vector<32x128xf32>
    %70 = vector.shape_cast %69 : vector<32x128xf32> to vector<4x8x128xf32>
    %cst_21 = arith.constant dense<0.000000e+00> : vector<8x128xf32>
    %71 = vector.multi_reduction <add>, %70, %cst_21 [0] : vector<4x8x128xf32> to vector<8x128xf32>
    %72 = vector.shape_cast %71 : vector<8x128xf32> to vector<1x8x128xf32>
    %c0_22 = arith.constant 0 : index
    %c0_23 = arith.constant 0 : index
    %c0_24 = arith.constant 0 : index
    %73 = vector.load %arg5[%c0_22, %c0_23, %c0_24] : memref<1x8x128xf32, #tpu.memory_space<vmem>>, vector<1x8x128xf32>
    tpu.vector_store %arg5[%c0_22, %c0_23, %c0_24], %72 {strides = array<i32>} : memref<1x8x128xf32, #tpu.memory_space<vmem>>, vector<1x8x128xf32>,
    return
  }
  func.func @transform_0(%arg0: i32) -> (i32, i32) {
    %c0_i32 = arith.constant 0 : i32
    %c0_i32_0 = arith.constant 0 : i32
    return %arg0, %c0_i32 : i32, i32
  }
  func.func @transform_1(%arg0: i32) -> (i32, i32) {
    %c0_i32 = arith.constant 0 : i32
    %c0_i32_0 = arith.constant 0 : i32
    return %arg0, %c0_i32 : i32, i32
  }
  func.func @transform_2(%arg0: i32) -> (i32, i32) {
    %c0_i32 = arith.constant 0 : i32
    %c0_i32_0 = arith.constant 0 : i32
    %c0_i32_1 = arith.constant 0 : i32
    return %c0_i32, %c0_i32_0 : i32, i32
  }
  func.func @transform_3(%arg0: i32) -> (i32, i32) {
    %c0_i32 = arith.constant 0 : i32
    %c0_i32_0 = arith.constant 0 : i32
    %c0_i32_1 = arith.constant 0 : i32
    return %c0_i32, %c0_i32_0 : i32, i32
  }
  func.func @transform_4(%arg0: i32) -> (i32, i32, i32) {
    %c0_i32 = arith.constant 0 : i32
    %c0_i32_0 = arith.constant 0 : i32
    %c0_i32_1 = arith.constant 0 : i32
    return %arg0, %c0_i32, %c0_i32_0 : i32, i32, i32
  }
}

</mosaic_0001>

<llo_original>
// kernel: tpu_custom_call.1
$region0: #{tpu_custom_call.1}
  #allocation0 [shape = 'u32[]', space=smem, size = 0x4, offset = 0x4, fixed_abs, tag = 'smem constant byte address 0x4 - core index']
  #allocation1 [shape = 'u32[144,128]{1,0:T(1,128)}', space=vmem, size = 0x12000, scoped, tag = 'internal scratch']
  %s0 = inlined_call_operand.hbm [shape: bf16[64,128], index: 0, kind: input, shape index: {}]
  %s1 = inlined_call_operand.hbm [shape: bf16[64,128], index: 1, kind: input, shape index: {}]
  %s2 = inlined_call_operand.vmem [shape: f32[1,128], index: 2, kind: input, shape index: {}]
  %s3 = inlined_call_operand.vmem [shape: f32[1,128], index: 3, kind: input, shape index: {}]
  %s4 = inlined_call_operand.hbm [shape: f32[2,8,128], index: 4, kind: output, shape index: {}]
  %s5 = sld [smem:[#allocation0]]
  $region57: #{tpu_custom_call.1} parent=0
    _
  %s7 = ssub.s32 1, %s5
  %s8 = scalar_select 0, %s7, %s5
  $region1: #{tpu_custom_call.1} parent=0
    #allocation2 [shape = 'u8[16384]{0}', space=vmem, size = 0x4000, scoped, tag = 'input window, operand 0']
    #allocation3 [shape = 's32[2]{0}', space=sflag, size = 0x8, scoped, tag = 'scoped memory for tpu_custom_call.1']
    #allocation4 [shape = 's32[2]{0}', space=sflag, size = 0x8, scoped, tag = 'scoped memory for tpu_custom_call.1']
    #allocation5 [shape = 'u8[16384]{0}', space=vmem, size = 0x4000, scoped, tag = 'input window, operand 1']
    #allocation6 [shape = 's32[2]{0}', space=sflag, size = 0x8, scoped, tag = 'scoped memory for tpu_custom_call.1']
    #allocation7 [shape = 'u8[8192]{0}', space=vmem, size = 0x2000, scoped, tag = 'output window, operand 0']
    %9 = vsyncpa [#allocation3], 0
    %s10 = scalar_lea.sflag [#allocation3], 1
    %11 = vsyncpa %s10, 0
    %12 = vsyncpa [#allocation6], 0
    %s13 = scalar_lea.sflag [#allocation6], 1
    %14 = vsyncpa %s13, 0
    %15 = vsyncpa [#allocation4], 0
    %s16 = scalar_lea.sflag [#allocation4], 1
    %17 = vsyncpa %s16, 0
    loop: start=0, step=1, limit=4
    $region2: #{tpu_custom_call.1} parent=1 // loop_pre_header
      _
    $region3: #{tpu_custom_call.1} parent=1 // loop_header
      %s19 = sphi 0, %s23
      %p20 = scmp.ge.s32.totalorder %s19, 4
      %s29 = sphi 0, %s31
      %s32 = sphi 0, %s29
      %s33 = sphi 0, %s32
      %s49 = sphi 0, %s33
      %s55 = sphi 0, %s57
      %s58 = sphi 0, %s55
      %s59 = sphi 0, %s58
      %s75 = sphi 0, %s59
      %s79 = sphi 0, %s79
      %s81 = sphi 0, %s79
      %s82 = sphi 0, %s81
      %s96 = sphi 0, %s82
      %s100 = sphi 0, %s100
      %s102 = sphi 0, %s100
      %s103 = sphi 0, %s102
      %s117 = sphi 0, %s103
      %s123 = sphi 0, %s125
      %s126 = sphi 0, %s123
      %s127 = sphi 0, %s126
      %s143 = sphi 0, %s127
    $region4: #{tpu_custom_call.1} parent=1 // loop_header_branch
      %22 = sbr.rel (%p20) target = $region8
    $region5: #{tpu_custom_call.1} parent=1 // loop_body
      %s24 = ssub.s32 %s19, 1
      %s25 = ssub.s32 %s19, 2
      %s26 = sadd.s32 %s19, 1
      %s27 = ssub.s32 %s19, %s26
      %p28 = scmp.eq.s32.totalorder %s27, 0
      %s30 = sadd.s32 %s29, 1
      %s31 = scalar_select %p28, %s29, %s30
      %p34 = pneg %p28
      %p35 = scmp.eq.s32.totalorder %s19, 1
      %p36 = por %p34, %p35
      %p37 = scmp.ne.s32.totalorder %s29, %s32
      %p38 = scmp.eq.s32.totalorder %s19, 0
      %p39 = por %p37, %p38
      %p40 = scmp.ne.s32.totalorder %s29, %s32
      %p41 = scmp.eq.s32.totalorder %s24, 1
      %p42 = por %p40, %p41
      %p43 = scmp.ne.s32.totalorder %s32, %s33
      %p44 = scmp.eq.s32.totalorder %s24, 0
      %p45 = por %p43, %p44
      %p46 = scmp.ne.s32.totalorder %s32, %s33
      %p47 = scmp.eq.s32.totalorder %s25, 1
      %p48 = por %p46, %p47
      %p50 = scmp.ne.s32.totalorder %s33, %s49
      %p51 = scmp.eq.s32.totalorder %s25, 0
      %p52 = por %p50, %p51
      %s53 = ssub.s32 %s19, %s26
      %p54 = scmp.eq.s32.totalorder %s53, 0
      %s56 = sadd.s32 %s55, 1
      %s57 = scalar_select %p54, %s55, %s56
      %p60 = pneg %p54
      %p61 = scmp.eq.s32.totalorder %s19, 1
      %p62 = por %p60, %p61
      %p63 = scmp.ne.s32.totalorder %s55, %s58
      %p64 = scmp.eq.s32.totalorder %s19, 0
      %p65 = por %p63, %p64
      %p66 = scmp.ne.s32.totalorder %s55, %s58
      %p67 = scmp.eq.s32.totalorder %s24, 1
      %p68 = por %p66, %p67
      %p69 = scmp.ne.s32.totalorder %s58, %s59
      %p70 = scmp.eq.s32.totalorder %s24, 0
      %p71 = por %p69, %p70
      %p72 = scmp.ne.s32.totalorder %s58, %s59
      %p73 = scmp.eq.s32.totalorder %s25, 1
      %p74 = por %p72, %p73
      %p76 = scmp.ne.s32.totalorder %s59, %s75
      %p77 = scmp.eq.s32.totalorder %s25, 0
      %p78 = por %p76, %p77
      %s80 = sadd.s32 %s79, 1
      %p83 = scmp.eq.s32.totalorder %s19, 1
      %p84 = scmp.ne.s32.totalorder %s79, %s81
      %p85 = scmp.eq.s32.totalorder %s19, 0
      %p86 = por %p84, %p85
      %p87 = scmp.ne.s32.totalorder %s79, %s81
      %p88 = scmp.eq.s32.totalorder %s24, 1
      %p89 = por %p87, %p88
      %p90 = scmp.ne.s32.totalorder %s81, %s82
      %p91 = scmp.eq.s32.totalorder %s24, 0
      %p92 = por %p90, %p91
      %p93 = scmp.ne.s32.totalorder %s81, %s82
      %p94 = scmp.eq.s32.totalorder %s25, 1
      %p95 = por %p93, %p94
      %p97 = scmp.ne.s32.totalorder %s82, %s96
      %p98 = scmp.eq.s32.totalorder %s25, 0
      %p99 = por %p97, %p98
      %s101 = sadd.s32 %s100, 1
      %p104 = scmp.eq.s32.totalorder %s19, 1
      %p105 = scmp.ne.s32.totalorder %s100, %s102
      %p106 = scmp.eq.s32.totalorder %s19, 0
      %p107 = por %p105, %p106
      %p108 = scmp.ne.s32.totalorder %s100, %s102
      %p109 = scmp.eq.s32.totalorder %s24, 1
      %p110 = por %p108, %p109
      %p111 = scmp.ne.s32.totalorder %s102, %s103
      %p112 = scmp.eq.s32.totalorder %s24, 0
      %p113 = por %p111, %p112
      %p114 = scmp.ne.s32.totalorder %s102, %s103
      %p115 = scmp.eq.s32.totalorder %s25, 1
      %p116 = por %p114, %p115
      %p118 = scmp.ne.s32.totalorder %s103, %s117
      %p119 = scmp.eq.s32.totalorder %s25, 0
      %p120 = por %p118, %p119
      %s121 = ssub.s32 %s19, %s26
      %p122 = scmp.eq.s32.totalorder %s121, 0
      %s124 = sadd.s32 %s123, 1
      %s125 = scalar_select %p122, %s123, %s124
      %p128 = pneg %p122
      %p129 = scmp.eq.s32.totalorder %s19, 1
      %p130 = por %p128, %p129
      %p131 = scmp.ne.s32.totalorder %s123, %s126
      %p132 = scmp.eq.s32.totalorder %s19, 0
      %p133 = por %p131, %p132
      %p134 = scmp.ne.s32.totalorder %s123, %s126
      %p135 = scmp.eq.s32.totalorder %s24, 1
      %p136 = por %p134, %p135
      %p137 = scmp.ne.s32.totalorder %s126, %s127
      %p138 = scmp.eq.s32.totalorder %s24, 0
      %p139 = por %p137, %p138
      %p140 = scmp.ne.s32.totalorder %s126, %s127
      %p141 = scmp.eq.s32.totalorder %s25, 1
      %p142 = por %p140, %p141
      %p144 = scmp.ne.s32.totalorder %s127, %s143
      %p145 = scmp.eq.s32.totalorder %s25, 0
      %p146 = por %p144, %p145
      %p147 = scmp.le.s32.totalorder 1, %s19
      %p148 = scmp.lt.s32.totalorder %s19, 3
      %p149 = pnand %p147, %p148
      %p150 = pneg %p149
      // Predicated region
      $region9: #{tpu_custom_call.1} parent=5 // pred_check
        _
      $region10: #{tpu_custom_call.1} parent=5 // pred_check_branch
        %152 = sbr.rel (%p149) target = $region12
      $region11: #{tpu_custom_call.1} parent=5 // pred_region
        %s153 = ssub.s32 %s19, 1
        // Predicated region
        $region13: #{tpu_custom_call.1} parent=11 // pred_check
          %p154 = pneg %p92
        $region14: #{tpu_custom_call.1} parent=11 // pred_check_branch
          %156 = sbr.rel (%p154) target = $region16
        $region15: #{tpu_custom_call.1} parent=11 // pred_region
          _
        $region16: #{tpu_custom_call.1} parent=11 // pred_fallthru
          _
        // Predicated region
        $region17: #{tpu_custom_call.1} parent=11 // pred_check
          %p157 = pneg %p113
        $region18: #{tpu_custom_call.1} parent=11 // pred_check_branch
          %159 = sbr.rel (%p157) target = $region20
        $region19: #{tpu_custom_call.1} parent=11 // pred_region
          _
        $region20: #{tpu_custom_call.1} parent=11 // pred_fallthru
          _
      $region12: #{tpu_custom_call.1} parent=5 // pred_fallthru
        _
      %p160 = scmp.lt.s32.totalorder %s19, 2
      // Predicated region
      $region21: #{tpu_custom_call.1} parent=5 // pred_check
        %p161 = pneg %p160
      $region22: #{tpu_custom_call.1} parent=5 // pred_check_branch
        %163 = sbr.rel (%p161) target = $region24
      $region23: #{tpu_custom_call.1} parent=5 // pred_region
        // Predicated region
        $region25: #{tpu_custom_call.1} parent=23 // pred_check
          %p164 = pneg %p39
        $region26: #{tpu_custom_call.1} parent=23 // pred_check_branch
          %166 = sbr.rel (%p164) target = $region28
        $region27: #{tpu_custom_call.1} parent=23 // pred_region
          %s167 = sand.u32 %s29, 1
          %s168 = scalar_lea.sflag [#allocation3], %s167
          %s169 = sand.u32 %s29, 1
          %s170 = smul.addr %s169, 16
          %s171 = scalar_lea.vmem [#allocation2], %s170
          %s172 = smul.u32 4, %s19
          %s174 = ssub.s32 256, 256
          %175 = vsyncadd %s168, %s174
          %s176 = smul.addr %s172, 64
          %s177 = scalar_lea.hbm %s0, %s176
          %s178 = sshll.u32 %s171, 4
          %s179 = int_to_ptr.vmem [resolvable:$true] %s178
          %184 = dma.hbm_to_vmem [thread:$0]  %s177, 256, %s179, %s168, 64, 64, 4
        $region28: #{tpu_custom_call.1} parent=23 // pred_fallthru
          _
        // Predicated region
        $region29: #{tpu_custom_call.1} parent=23 // pred_check
          %p185 = pneg %p65
        $region30: #{tpu_custom_call.1} parent=23 // pred_check_branch
          %187 = sbr.rel (%p185) target = $region32
        $region31: #{tpu_custom_call.1} parent=23 // pred_region
          %s188 = sand.u32 %s55, 1
          %s189 = scalar_lea.sflag [#allocation6], %s188
          %s190 = sand.u32 %s55, 1
          %s191 = smul.addr %s190, 16
          %s192 = scalar_lea.vmem [#allocation5], %s191
          %s193 = smul.u32 4, %s19
          %s195 = ssub.s32 256, 256
          %196 = vsyncadd %s189, %s195
          %s197 = smul.addr %s193, 64
          %s198 = scalar_lea.hbm %s1, %s197
          %s199 = sshll.u32 %s192, 4
          %s200 = int_to_ptr.vmem [resolvable:$true] %s199
          %205 = dma.hbm_to_vmem [thread:$0]  %s198, 256, %s200, %s189, 64, 64, 4
        $region32: #{tpu_custom_call.1} parent=23 // pred_fallthru
          _
      $region24: #{tpu_custom_call.1} parent=5 // pred_fallthru
        _
      %p206 = scmp.le.s32.totalorder 1, %s19
      %p207 = scmp.lt.s32.totalorder %s19, 3
      %p208 = pnand %p206, %p207
      %p209 = pneg %p208
      // Predicated region
      $region33: #{tpu_custom_call.1} parent=5 // pred_check
        _
      $region34: #{tpu_custom_call.1} parent=5 // pred_check_branch
        %211 = sbr.rel (%p208) target = $region36
      $region35: #{tpu_custom_call.1} parent=5 // pred_region
        %s212 = ssub.s32 %s19, 1
        %s213 = sand.u32 %s32, 1
        %s214 = scalar_lea.sflag [#allocation3], %s213
        %s215 = sand.u32 %s32, 1
        %s216 = smul.addr %s215, 16
        %s217 = scalar_lea.vmem [#allocation2], %s216
        // Predicated region
        $region37: #{tpu_custom_call.1} parent=35 // pred_check
          %p218 = pneg %p45
        $region38: #{tpu_custom_call.1} parent=35 // pred_check_branch
          %220 = sbr.rel (%p218) target = $region40
        $region39: #{tpu_custom_call.1} parent=35 // pred_region
          %221 = dma.done %s214, 256
        $region40: #{tpu_custom_call.1} parent=35 // pred_fallthru
          _
        %s222 = sand.u32 %s58, 1
        %s223 = scalar_lea.sflag [#allocation6], %s222
        %s224 = sand.u32 %s58, 1
        %s225 = smul.addr %s224, 16
        %s226 = scalar_lea.vmem [#allocation5], %s225
        // Predicated region
        $region41: #{tpu_custom_call.1} parent=35 // pred_check
          %p227 = pneg %p71
        $region42: #{tpu_custom_call.1} parent=35 // pred_check_branch
          %229 = sbr.rel (%p227) target = $region44
        $region43: #{tpu_custom_call.1} parent=35 // pred_region
          %230 = dma.done %s223, 256
        $region44: #{tpu_custom_call.1} parent=35 // pred_fallthru
          _
        %s231 = sand.u32 %s32, 1
        %s232 = scalar_lea.sflag [#allocation3], %s231
        %s233 = sand.u32 %s32, 1
        %s234 = smul.addr %s233, 16
        %s235 = scalar_lea.vmem [#allocation2], %s234
        %p236 = pneg %p45
        %p237 = pneg %p42
        %s238 = sand.u32 %s58, 1
        %s239 = scalar_lea.sflag [#allocation6], %s238
        %s240 = sand.u32 %s58, 1
        %s241 = smul.addr %s240, 16
        %s242 = scalar_lea.vmem [#allocation5], %s241
        %p243 = pneg %p71
        %p244 = pneg %p68
        %p245 = pneg %p92
        %p246 = pneg %p89
        %p247 = pneg %p113
        %p248 = pneg %p110
        %p249 = pneg %p139
        %p250 = pneg %p136
        %s251 = sand.u32 %s126, 1
        %s252 = scalar_lea.sflag [#allocation4], %s251
        %s253 = sand.u32 %s126, 1
        %s254 = smul.addr %s253, 8
        %s255 = scalar_lea.vmem [#allocation7], %s254
        %s256 = smul.u32 4, %s24
        %s257 = smul.u32 4, %s24
        %v258 = vld [vmem:[%s217] sm:$0xf]
        %v259 = vld [vmem:[%s217 + $0x4] sm:$0xf]
        %v260 = vld [vmem:[%s217 + $0x8] sm:$0xf]
        %v261 = vld [vmem:[%s217 + $0xc] sm:$0xf]
        %v262 = vunpack.c.l.bf16 %v258
        %v263 = vunpack.c.l.bf16 %v259
        %v264 = vunpack.c.l.bf16 %v260
        %v265 = vunpack.c.l.bf16 %v261
        %v266 = vld [vmem:[%s226] sm:$0xf]
        %v267 = vld [vmem:[%s226 + $0x4] sm:$0xf]
        %v268 = vld [vmem:[%s226 + $0x8] sm:$0xf]
        %v269 = vld [vmem:[%s226 + $0xc] sm:$0xf]
        %v270 = vunpack.c.l.bf16 %v266
        %v271 = vunpack.c.l.bf16 %v267
        %v272 = vunpack.c.l.bf16 %v268
        %v273 = vunpack.c.l.bf16 %v269
        %v274 = vld [vmem:[%s2] sm:$0x1]
        %v275 = vld [vmem:[%s3] sm:$0x1]
        %v276 = vlaneseq
        %v277 = vand.u32 %v276, 127
        %vm278 = vcmp.lt.s32.totalorder %v277, 96
        %v279 = vlaneseq
        %v280 = vshrl.u32 %v279, 7
        %v281 = vadd.s32 %v280, 8
        %v282 = vadd.s32 %v280, 16
        %v283 = vadd.s32 %v280, 24
        %s284 = smul.u32 %s24, 32
        %v285 = vstv %s284
        %v286 = vadd.s32 %v280, %v285
        %v287 = vadd.s32 %v281, %v285
        %v288 = vadd.s32 %v282, %v285
        %v289 = vadd.s32 %v283, %v285
        %vm290 = vcmp.lt.s32.totalorder %v286, 40
        %vm291 = vcmp.lt.s32.totalorder %v287, 40
        %vm292 = vcmp.lt.s32.totalorder %v288, 40
        %vm293 = vcmp.lt.s32.totalorder %v289, 40
        %v295 = vlaneseq
        %v296 = vshrl.u32 %v295, 7
        %v297 = vsub.s32 0, %v296
        %v298 = vrot.slane %v274, %v297
        %v300 = vmul.f32 %v270, %v298
        %v301 = vmul.f32 %v271, %v298
        %v302 = vmul.f32 %v272, %v298
        %v303 = vmul.f32 %v273, %v298
        %304 = vadd.xlane.f32.xlu0 %v300
        %v305 = vpop.xlane.xlu0 %304
        %306 = vadd.xlane.f32.xlu0 %v301
        %v307 = vpop.xlane.xlu0 %306
        %308 = vadd.xlane.f32.xlu0 %v302
        %v309 = vpop.xlane.xlu0 %308
        %310 = vadd.xlane.f32.xlu0 %v303
        %v311 = vpop.xlane.xlu0 %310
        %v312 = vmax.f32 %v305, 1e-08
        %v313 = vmax.f32 %v307, 1e-08
        %v314 = vmax.f32 %v309, 1e-08
        %v315 = vmax.f32 %v311, 1e-08
        %v316 = vrcp.pop %v312
        %v317 = vrcp.pop %v313
        %v318 = vrcp.pop %v314
        %v319 = vrcp.pop %v315
        %v320 = vmul.f32 %v298, %v316
        %v321 = vmul.f32 %v298, %v317
        %v322 = vmul.f32 %v298, %v318
        %v323 = vmul.f32 %v298, %v319
        %v324 = vsub.f32 %v320, 0.1
        %v325 = vsub.f32 %v321, 0.1
        %v326 = vsub.f32 %v322, 0.1
        %v327 = vsub.f32 %v323, 0.1
        %v328 = vmul.f32 %v324, 0.2
        %v329 = vmul.f32 %v325, 0.2
        %v330 = vmul.f32 %v326, 0.2
        %v331 = vmul.f32 %v327, 0.2
        %v332 = vxor.u32 %v328, 2147483648
        %v333 = vxor.u32 %v329, 2147483648
        %v334 = vxor.u32 %v330, 2147483648
        %v335 = vxor.u32 %v331, 2147483648
        %v336 = vmul.f32 %v332, 1.442695
        %v337 = vpow.pop %v336
        %v338 = vmul.f32 %v333, 1.442695
        %v339 = vpow.pop %v338
        %v340 = vmul.f32 %v334, 1.442695
        %v341 = vpow.pop %v340
        %v342 = vmul.f32 %v335, 1.442695
        %v343 = vpow.pop %v342
        %v344 = vadd.f32 %v337, 1.0
        %v345 = vadd.f32 %v339, 1.0
        %v346 = vadd.f32 %v341, 1.0
        %v347 = vadd.f32 %v343, 1.0
        %v348 = vrcp.pop %v344
        %v349 = vmul.f32 1.0, %v348
        %v350 = vrcp.pop %v345
        %v351 = vmul.f32 1.0, %v350
        %v352 = vrcp.pop %v346
        %v353 = vmul.f32 1.0, %v352
        %v354 = vrcp.pop %v347
        %v355 = vmul.f32 1.0, %v354
        %v356 = vadd.f32 %v349, 10.0
        %v357 = vadd.f32 %v351, 10.0
        %v358 = vadd.f32 %v353, 10.0
        %v359 = vadd.f32 %v355, 10.0
        %v360 = vsel %vm278, 1, 0
        %vm361 = vcmp.eq.s32.totalorder %v360, 1
        %v362 = vsel %vm361, %v356, 0.0
        %v363 = vsel %vm361, %v357, 0.0
        %v364 = vsel %vm361, %v358, 0.0
        %v365 = vsel %vm361, %v359, 0.0
        %366 = vmax.xlane.f32.xlu0 %v362
        %v367 = vpop.xlane.xlu0 %366
        %368 = vmax.xlane.f32.xlu0 %v363
        %v369 = vpop.xlane.xlu0 %368
        %370 = vmax.xlane.f32.xlu0 %v364
        %v371 = vpop.xlane.xlu0 %370
        %372 = vmax.xlane.f32.xlu0 %v365
        %v373 = vpop.xlane.xlu0 %372
        %v374 = vrcp.pop %v367
        %v375 = vrcp.pop %v369
        %v376 = vrcp.pop %v371
        %v377 = vrcp.pop %v373
        %v378 = vsel %vm290, %v374, 0.0
        %v379 = vsel %vm291, %v375, 0.0
        %v380 = vsel %vm292, %v376, 0.0
        %v381 = vsel %vm293, %v377, 0.0
        %v382 = vmul.f32 %v362, %v378
        %v383 = vmul.f32 %v363, %v379
        %v384 = vmul.f32 %v364, %v380
        %v385 = vmul.f32 %v365, %v381
        %v387 = vlaneseq
        %v388 = vshrl.u32 %v387, 7
        %v389 = vsub.s32 0, %v388
        %v390 = vrot.slane %v275, %v389
        %v392 = vadd.f32 %v262, %v390
        %v393 = vadd.f32 %v263, %v390
        %v394 = vadd.f32 %v264, %v390
        %v395 = vadd.f32 %v265, %v390
        %v396 = vmul.f32 %v270, -4.0
        %v397 = vmul.f32 %v271, -4.0
        %v398 = vmul.f32 %v272, -4.0
        %v399 = vmul.f32 %v273, -4.0
        %v400 = vadd.f32 %v396, 5.0
        %v401 = vadd.f32 %v397, 5.0
        %v402 = vadd.f32 %v398, 5.0
        %v403 = vadd.f32 %v399, 5.0
        %v404 = vmul.f32 %v392, %v400
        %v405 = vmul.f32 %v393, %v401
        %v406 = vmul.f32 %v394, %v402
        %v407 = vmul.f32 %v395, %v403
        %v408 = vmul.f32 %v270, 0.8
        %v409 = vmul.f32 %v271, 0.8
        %v410 = vmul.f32 %v272, 0.8
        %v411 = vmul.f32 %v273, 0.8
        %v412 = vadd.f32 %v408, 0.2
        %v413 = vadd.f32 %v409, 0.2
        %v414 = vadd.f32 %v410, 0.2
        %v415 = vadd.f32 %v411, 0.2
        %v416 = vmul.f32 %v382, %v412
        %v417 = vmul.f32 %v383, %v413
        %v418 = vmul.f32 %v384, %v414
        %v419 = vmul.f32 %v385, %v415
        %v420 = vmax.f32 %v404, 0.0
        %v421 = vmax.f32 %v405, 0.0
        %v422 = vmax.f32 %v406, 0.0
        %v423 = vmax.f32 %v407, 0.0
        %v424 = vmul.f32 %v404, %v270
        %v425 = vmul.f32 %v405, %v271
        %v426 = vmul.f32 %v406, %v272
        %v427 = vmul.f32 %v407, %v273
        %v428 = vsub.f32 %v420, %v424
        %v429 = vsub.f32 %v421, %v425
        %v430 = vsub.f32 %v422, %v426
        %v431 = vsub.f32 %v423, %v427
        %v432 = vand.u32 2147483647, %v404
        %v433 = vand.u32 2147483647, %v405
        %v434 = vand.u32 2147483647, %v406
        %v435 = vand.u32 2147483647, %v407
        %v436 = vsub.f32 0.0, %v432
        %v437 = vsub.f32 0.0, %v433
        %v438 = vsub.f32 0.0, %v434
        %v439 = vsub.f32 0.0, %v435
        %v440 = vmul.f32 %v436, 1.442695
        %v441 = vpow.pop %v440
        %v442 = vmul.f32 %v437, 1.442695
        %v443 = vpow.pop %v442
        %v444 = vmul.f32 %v438, 1.442695
        %v445 = vpow.pop %v444
        %v446 = vmul.f32 %v439, 1.442695
        %v447 = vpow.pop %v446
        %v448 = vadd.f32 %v441, 1.0
        %v449 = vlog2.pop %v448
        %v450 = vmul.f32 %v449, 0.6931472
        %v451 = vmul.f32 -0.5, %v441
        %v452 = vadd.f32 %v451, 1.0
        %v453 = vmul.f32 %v452, %v441
        %v454 = vand.u32 2147483647, %v441
        %vm455 = vcmp.lt.f32.partialorder %v454, 0.0004427343
        %v456 = vsel %vm455, %v453, %v450
        %v457 = vadd.f32 %v443, 1.0
        %v458 = vlog2.pop %v457
        %v459 = vmul.f32 %v458, 0.6931472
        %v460 = vmul.f32 -0.5, %v443
        %v461 = vadd.f32 %v460, 1.0
        %v462 = vmul.f32 %v461, %v443
        %v463 = vand.u32 2147483647, %v443
        %vm464 = vcmp.lt.f32.partialorder %v463, 0.0004427343
        %v465 = vsel %vm464, %v462, %v459
        %v466 = vadd.f32 %v445, 1.0
        %v467 = vlog2.pop %v466
        %v468 = vmul.f32 %v467, 0.6931472
        %v469 = vmul.f32 -0.5, %v445
        %v470 = vadd.f32 %v469, 1.0
        %v471 = vmul.f32 %v470, %v445
        %v472 = vand.u32 2147483647, %v445
        %vm473 = vcmp.lt.f32.partialorder %v472, 0.0004427343
        %v474 = vsel %vm473, %v471, %v468
        %v475 = vadd.f32 %v447, 1.0
        %v476 = vlog2.pop %v475
        %v477 = vmul.f32 %v476, 0.6931472
        %v478 = vmul.f32 -0.5, %v447
        %v479 = vadd.f32 %v478, 1.0
        %v480 = vmul.f32 %v479, %v447
        %v481 = vand.u32 2147483647, %v447
        %vm482 = vcmp.lt.f32.partialorder %v481, 0.0004427343
        %v483 = vsel %vm482, %v480, %v477
        %v484 = vadd.f32 %v428, %v456
        %v485 = vadd.f32 %v429, %v465
        %v486 = vadd.f32 %v430, %v474
        %v487 = vadd.f32 %v431, %v483
        %v488 = vmul.f32 %v484, %v416
        %v489 = vmul.f32 %v485, %v417
        %v490 = vmul.f32 %v486, %v418
        %v491 = vmul.f32 %v487, %v419
        %v492 = vadd.f32 %v488, %v489
        %v493 = vadd.f32 %v492, %v490
        %v494 = vadd.f32 %v493, %v491
        %495 = vst [vmem:[%s255] sm:$0xff] %v494
        %s496 = sand.u32 %s126, 1
        %s497 = scalar_lea.sflag [#allocation4], %s496
        %s498 = sand.u32 %s126, 1
        %s499 = smul.addr %s498, 8
        %s500 = scalar_lea.vmem [#allocation7], %s499
        // Predicated region
        $region45: #{tpu_custom_call.1} parent=35 // pred_check
          %p501 = pneg %p136
        $region46: #{tpu_custom_call.1} parent=35 // pred_check_branch
          %503 = sbr.rel (%p501) target = $region48
        $region47: #{tpu_custom_call.1} parent=35 // pred_region
          %s505 = ssub.s32 128, 128
          %506 = vsyncadd %s497, %s505
          %s507 = smul.addr %s24, 128
          %s508 = scalar_lea.hbm %s4, %s507
          %s510 = sshll.u32 %s500, 4
          %s511 = int_to_ptr.vmem [resolvable:$true] %s510
          %513 = dma.vmem_to_hbm [thread:$0]  %s511, 128, %s508, %s497
        $region48: #{tpu_custom_call.1} parent=35 // pred_fallthru
          _
      $region36: #{tpu_custom_call.1} parent=5 // pred_fallthru
        _
      %p514 = scmp.le.s32.totalorder 2, %s19
      // Predicated region
      $region49: #{tpu_custom_call.1} parent=5 // pred_check
        %p515 = pneg %p514
      $region50: #{tpu_custom_call.1} parent=5 // pred_check_branch
        %517 = sbr.rel (%p515) target = $region52
      $region51: #{tpu_custom_call.1} parent=5 // pred_region
        %s518 = ssub.s32 %s19, 2
        // Predicated region
        $region53: #{tpu_custom_call.1} parent=51 // pred_check
          %p519 = pneg %p142
        $region54: #{tpu_custom_call.1} parent=51 // pred_check_branch
          %521 = sbr.rel (%p519) target = $region56
        $region55: #{tpu_custom_call.1} parent=51 // pred_region
          %s522 = sand.u32 %s127, 1
          %s523 = scalar_lea.sflag [#allocation4], %s522
          %s524 = sand.u32 %s127, 1
          %s525 = smul.addr %s524, 8
          %s526 = scalar_lea.vmem [#allocation7], %s525
          %527 = dma.done %s523, 128
        $region56: #{tpu_custom_call.1} parent=51 // pred_fallthru
          _
      $region52: #{tpu_custom_call.1} parent=5 // pred_fallthru
        _
    $region6: #{tpu_custom_call.1} parent=1 // loop_footer
      %s23 = sadd.s32 1, %s19
    $region7: #{tpu_custom_call.1} parent=1 // loop_footer_branch
      %18 = sbr.rel target = $region3
    $region8: #{tpu_custom_call.1} parent=1 // loop_exit
      _
    %528 = vsyncpa [#allocation3], 1
    %s529 = scalar_lea.sflag [#allocation3], 1
    %530 = vsyncpa %s529, 1
    %531 = vsyncpa [#allocation6], 1
    %s532 = scalar_lea.sflag [#allocation6], 1
    %533 = vsyncpa %s532, 1
    %534 = vsyncpa [#allocation4], 1
    %s535 = scalar_lea.sflag [#allocation4], 1
    %536 = vsyncpa %s535, 1

</llo_original>
